<compile_context>
chip_gen: v6e
topology: v6e:2x2x1
jax: 0.10.0
libtpu: 0.0.40
codegen_flags: <defaults>
</compile_context>

<pallas_src>
import math
import functools

import jax
import jax.numpy as jnp
from jax.scipy.special import digamma
from jax.experimental import pallas as pl
from jax.experimental.pallas import tpu as pltpu

LANE = 128


def _round_up(x, m):
    return ((x + m - 1) // m) * m


def _row_tile(n_pad):
    """Largest row tile in {512,256,128} dividing the (128-padded) row count."""
    for t in (512, 256, 128):
        if n_pad % t == 0:
            return t
    return 128


def _hash_uniform(seed_u32, salt, shape, row_offset):
    """Counter-based Uniform(0,1) from portable 32-bit integer VPU ops.

    Works under both Mosaic (TPU) and interpret mode — no TPU-only PRNG
    primitives — while keeping all randomness on-chip (no HBM mask stream).
    """
    rows = (jax.lax.broadcasted_iota(jnp.int32, shape, 0)
            + row_offset).astype(jnp.uint32)
    cols = jax.lax.broadcasted_iota(jnp.int32, shape, 1).astype(jnp.uint32)
    salt_c = jnp.uint32((int(salt) * 0x9E3779B9) & 0xFFFFFFFF)
    h = seed_u32 + salt_c
    h = h ^ (rows * jnp.uint32(0x85EBCA77))
    h = h ^ (cols * jnp.uint32(0xC2B2AE3D))
    # murmur3-style finalizer
    h = h ^ (h >> 16)
    h = h * jnp.uint32(0x7FEB352D)
    h = h ^ (h >> 15)
    h = h * jnp.uint32(0x846CA68B)
    h = h ^ (h >> 16)
    # top 24 bits -> [0,1)
    u = (h >> 8).astype(jnp.int32).astype(jnp.float32) * (1.0 / 16777216.0)
    return jnp.clip(u, 1e-6, 1.0 - 1e-6)


# ----------------------------------------------------------------------------
# Pallas kernel: one GCN layer = sum over `nblock` GraphConvolutions:
#   out = sum_j (mask_j * adj_normt) @ support_j  +  sum_j b_j
# with support_j = x_j @ W_j hoisted to the wrapper, masks sampled on-chip
# (relaxed Bernoulli, temp) and an in-kernel ReLU/dropout/log_softmax epilogue.
# Grid tiles node rows ("parallel").
# ----------------------------------------------------------------------------
def _bgcn_layer_kernel(seed_ref, logit_ref, adj_ref, sup_ref, bsum_ref, out_ref,
                       *, nblock, fout, temp, keep_prob, row_tile,
                       apply_relu, apply_dropout, apply_log_softmax):
    i = pl.program_id(0)
    row_off = i * row_tile

    seed_u32 = seed_ref[0].astype(jnp.uint32)
    logit = logit_ref[0]                       # scalar logit(pi) for this layer
    inv_temp = 1.0 / temp

    adj = adj_ref[...].astype(jnp.float32)     # (tm, Np) rows of adj_normt (bf16 in HBM)

    # start from the summed bias (== adding b_j once per block, summed)
    acc = jnp.zeros(out_ref.shape, jnp.float32) + bsum_ref[...]

    # Static unroll: nblock is small (1-4).
    # TODO(synk): for large nblock switch to lax.fori_loop(unroll=True) and/or
    # fuse the blocks into one (tm, nblock*Np) @ (nblock*Np, fpad) contraction
    # (v5e/v6e MRF win).
    for j in range(nblock):
        # relaxed-Bernoulli DropConnect mask, generated on-chip:
        # sigmoid((logit + log(u/(1-u))) / temp)  -> 1 log + 1 exp per element
        u = _hash_uniform(seed_u32, j, adj.shape, row_off)
        t = (logit + jnp.log(u / (1.0 - u))) * inv_temp
        mask = 1.0 / (1.0 + jnp.exp(-t))
        # (mask_j * adj) @ support_j  -> (tm, fpad), bf16 MXU operands, f32 acc
        madj = (mask * adj).astype(jnp.bfloat16)
        acc = acc + jnp.dot(madj, sup_ref[j],
                            preferred_element_type=jnp.float32)

    if apply_relu:
        acc = jnp.maximum(acc, 0.0)

    if apply_dropout:
        keep = _hash_uniform(seed_u32, nblock + 1, acc.shape, row_off) < keep_prob
        acc = jnp.where(keep, acc * (1.0 / keep_prob), 0.0)

    if apply_log_softmax:
        # softmax only over the first `fout` (real) lanes; padded lanes masked.
        # NOTE: padded lanes of the final output are junk — callers must slice
        # [:, :fout].  Hidden layers keep padded lanes exactly 0 (zero W/bias pad).
        lane = jax.lax.broadcasted_iota(jnp.int32, acc.shape, 1)
        valid = lane < fout
        masked = jnp.where(valid, acc, jnp.float32(-1e30))
        m = jnp.max(masked, axis=1, keepdims=True)
        e = jnp.where(valid, jnp.exp(acc - m), 0.0)
        acc = acc - m - jnp.log(jnp.sum(e, axis=1, keepdims=True))

    out_ref[...] = acc                         # lane-dense (tm, fpad) store


def bgcn_gcn_layer(seed, logit, adj_pad, support, b_sum, *, fout,
                   temp=0.67, keep_prob=1.0, apply_relu=False,
                   apply_dropout=False, apply_log_softmax=False):
    """seed:(1,)i32  logit:(1,)f32  adj_pad:(Np,Np)bf16  support:(nb,Np,fpad)bf16
       b_sum:(1,fpad)f32  ->  (Np, fpad) f32 (padded lanes junk/0)."""
    Np = adj_pad.shape[0]
    nblock, _, fpad = support.shape
    tm = _row_tile(Np)

    kernel = functools.partial(
        _bgcn_layer_kernel,
        nblock=nblock, fout=fout, temp=temp, keep_prob=keep_prob,
        row_tile=tm, apply_relu=apply_relu,
        apply_dropout=apply_dropout, apply_log_softmax=apply_log_softmax)

    flops = 2 * nblock * Np * Np * fpad
    transcendentals = 2 * nblock * Np * Np
    bytes_accessed = (Np * Np * 2 + nblock * Np * fpad * 2
                      + Np * fpad * 4 + fpad * 4 + 8)

    return pl.pallas_call(
        kernel,
        out_shape=jax.ShapeDtypeStruct((Np, fpad), jnp.float32),
        grid_spec=pltpu.PrefetchScalarGridSpec(
            num_scalar_prefetch=0,
            grid=(Np // tm,),
            in_specs=[
                pl.BlockSpec(memory_space=pltpu.MemorySpace.SMEM),   # seed  (1,) i32
                pl.BlockSpec(memory_space=pltpu.MemorySpace.SMEM),   # logit (1,) f32
                pl.BlockSpec((tm, Np), lambda i: (i, 0)),            # adj row tile (bf16)
                pl.BlockSpec((nblock, Np, fpad), lambda i: (0, 0, 0)),  # hoisted supports
                pl.BlockSpec((1, fpad), lambda i: (0, 0)),           # summed bias
            ],
            out_specs=pl.BlockSpec((tm, fpad), lambda i: (i, 0)),
        ),
        compiler_params=pltpu.CompilerParams(
            dimension_semantics=("parallel",),
            vmem_limit_bytes=32 * 1024 * 1024),
        cost_estimate=pl.CostEstimate(flops=flops,
                                      transcendentals=transcendentals,
                                      bytes_accessed=bytes_accessed),
    )(seed, logit, adj_pad, support, b_sum)


# ----------------------------------------------------------------------------
# BBGDC (beta-Bernoulli drop-connect) scalar glue — plain JAX.
# ----------------------------------------------------------------------------
def bbgdc_get_params(a_uc, b_uc):
    a = jax.nn.softplus(jnp.clip(a_uc, -10.0, None))
    b = jax.nn.softplus(jnp.clip(b_uc, -10.0, 50.0))
    return a, b


def bbgdc_sample_pi(key, a_uc, b_uc):
    a, b = bbgdc_get_params(a_uc, b_uc)
    u = jnp.clip(jax.random.uniform(key, a_uc.shape), 1e-6, 1.0 - 1e-6)
    return (1.0 - u ** (1.0 / b)) ** (1.0 / a)


def bbgdc_get_reg(a_uc, b_uc, alpha=0.8, kl_scale=1.0):
    a, b = bbgdc_get_params(a_uc, b_uc)
    kld = ((1.0 - alpha / a) * (-0.577215664901532 - digamma(b) - 1.0 / b)
           + jnp.log(a * b + 1e-10) - math.log(alpha) - (b - 1.0) / b)
    return kl_scale * jnp.sum(kld)


# ----------------------------------------------------------------------------
# Parameter init (mirrors the PyTorch __init__ distributions); weights/biases
# are pre-stacked per layer and lane-padded to a multiple of 128.
# ----------------------------------------------------------------------------
def init_params(key, nfeat_list, nblock, nlay):
    params = {'drpcon': [], 'layers': []}
    for _ in range(nlay):
        key, k1, k2 = jax.random.split(key, 3)
        a_uc = jax.random.uniform(k1, (1,), minval=1.0, maxval=1.5)
        b_uc = jax.random.uniform(k2, (1,), minval=0.49, maxval=0.51)
        params['drpcon'].append((a_uc, b_uc))

    def make_gc(k, fin, fout):
        k1, k2 = jax.random.split(k)
        stdv = 1.0 / math.sqrt(fout)
        W = stdv * jax.random.normal(k1, (fin, fout), dtype=jnp.float32)
        b = jax.random.uniform(k2, (fout,), minval=-stdv, maxval=stdv)
        return W, b

    for i in range(nlay):
        if i == 0:
            nb_i, fb_i = 1, nfeat_list[0]
        else:
            nb_i, fb_i = nblock, nfeat_list[i] // nblock
        fout_i = nfeat_list[i + 1]
        fpad_i = _round_up(fout_i, LANE)
        ws, bs = [], []
        for _ in range(nb_i):
            key, k = jax.random.split(key)
            W, b = make_gc(k, fb_i, fout_i)
            ws.append(jnp.pad(W, ((0, 0), (0, fpad_i - fout_i))))
            bs.append(b)
        w_blocks = jnp.stack(ws)                                   # (nb, fb, fpad)
        b_sum = jnp.pad(jnp.sum(jnp.stack(bs, axis=0), axis=0),
                        (0, fpad_i - fout_i)).reshape(1, fpad_i)   # (1, fpad)
        params['layers'].append({'w': w_blocks, 'b_sum': b_sum, 'fout': fout_i})
    return params


# ----------------------------------------------------------------------------
# Forward pass (mul_type='norm_first', samp_type='rel_ber', training=True).
# ----------------------------------------------------------------------------
def forward(params, x, labels, adj, obs_idx, warm_up, adj_normt, key, *,
            nfeat_list, nblock, nlay, dropout=0.5, training=True, temp=0.67):
    # TODO(synk): mul_type='norm_sec' path not implemented (normalize_torch is
    # undefined in the reference source); only the default 'norm_first' path.
    del adj  # unused on the 'norm_first' path

    N = adj_normt.shape[0]
    Np = _round_up(N, LANE)
    # pad + bf16-cast adj once; shared (resident in HBM as bf16) by all layers
    adj_pad = jnp.pad(adj_normt.astype(jnp.float32),
                      ((0, Np - N), (0, Np - N))).astype(jnp.bfloat16)
    h = jnp.pad(x.astype(jnp.float32), ((0, Np - N), (0, 0)))

    kld_loss = jnp.float32(0.0)
    drop_rates = []
    keys = jax.random.split(key, nlay + 1)
    seeds = jax.random.randint(keys[nlay], (nlay,), 0,
                               jnp.iinfo(jnp.int32).max, dtype=jnp.int32)

    for i in range(nlay):
        a_uc, b_uc = params['drpcon'][i]
        pi = bbgdc_sample_pi(keys[i], a_uc, b_uc)          # (1,) Kumaraswamy draw
        drop_rates.append(pi)
        pi_c = jnp.clip(pi, 1e-6, 1.0 - 1e-6)
        logit = (jnp.log(pi_c) - jnp.log1p(-pi_c)).astype(jnp.float32)  # (1,)

        layer = params['layers'][i]
        w_blocks = layer['w']                              # (nb, fb, fpad)
        nb, fb, fpad = w_blocks.shape
        last = (i == nlay - 1)

        # Hoisted per-block support = x_j @ W_j (depends only on x and W):
        # plain XLA einsum once per layer, sliced to the real feature width so
        # no lane padding of the previous activations is touched; cast to bf16
        # so the kernel feeds the MXU bf16 operands directly.
        x_blocks = h[:, :nb * fb].reshape(Np, nb, fb).transpose(1, 0, 2)
        support = jnp.einsum('bnf,bfo->bno', x_blocks,
                             w_blocks).astype(jnp.bfloat16)   # (nb, Np, fpad)

        h = bgcn_gcn_layer(
            seeds[i:i + 1], logit, adj_pad, support, layer['b_sum'],
            fout=layer['fout'], temp=temp,
            keep_prob=1.0 - dropout,
            apply_relu=not last,
            apply_dropout=(training and dropout > 0.0 and not last),
            apply_log_softmax=last)
        kld_loss = kld_loss + bbgdc_get_reg(a_uc, b_uc)

    nclass = nfeat_list[-1]
    output = h[:N, :nclass]                    # strip row + lane padding (log-probs)
    preds_obs = output[obs_idx]
    labels_obs = labels[obs_idx]
    nll_loss = -jnp.mean(preds_obs[jnp.arange(obs_idx.shape[0]), labels_obs])
    tot_loss = nll_loss + warm_up * kld_loss
    drop_rates = jnp.stack(drop_rates)
    return output, tot_loss, nll_loss, kld_loss, drop_rates


# ----------------------------------------------------------------------------
if __name__ == "__main__":
    nfeat_list = [8, 16, 16, 4]      # nlay + 1 entries
    nlay, nblock = 3, 2
    N = 16                           # num_nodes
    dropout = 0.5
    warm_up = 0.01

    key = jax.random.PRNGKey(0)
    kp, kx, ka, kl, kf = jax.random.split(key, 5)

    params = init_params(kp, nfeat_list, nblock, nlay)

    x = jax.random.normal(kx, (N, nfeat_list[0]), dtype=jnp.float32)
    adj_rand = (jax.random.uniform(ka, (N, N)) < 0.3).astype(jnp.float32)
    adj = jnp.maximum(adj_rand, adj_rand.T)
    # symmetric normalization with self-loops (stand-in for adj_normt input)
    adj_sl = adj + jnp.eye(N, dtype=jnp.float32)
    dinv = 1.0 / jnp.sqrt(jnp.sum(adj_sl, axis=1))
    adj_normt = adj_sl * dinv[:, None] * dinv[None, :]

    labels = jax.random.randint(kl, (N,), 0, nfeat_list[-1])
    obs_idx = jnp.arange(8)

    output, tot_loss, nll_loss, kld_loss, drop_rates = forward(
        params, x, labels, adj, obs_idx, warm_up, adj_normt, kf,
        nfeat_list=nfeat_list, nblock=nblock, nlay=nlay,
        dropout=dropout, training=True)
    jax.block_until_ready((output, tot_loss, nll_loss, kld_loss, drop_rates))

    # sanity: rows of the final log_softmax output must be valid log-probs
    row_sums = jnp.sum(jnp.exp(output), axis=1)
    assert jnp.allclose(row_sums, 1.0, atol=1e-2), row_sums
    assert bool(jnp.isfinite(tot_loss)), tot_loss

    print("KERNEL_OK")
</pallas_src>

<mosaic_0001>
module attributes {stable_mosaic.version = 11 : i64} {
  func.func @_bgcn_layer_kernel(%arg0: i32, %arg1: memref<1xi32, #tpu.memory_space<smem>>, %arg2: memref<1xf32, #tpu.memory_space<smem>>, %arg3: memref<128x128xbf16, #tpu.memory_space<vmem>>, %arg4: memref<1x128x128xbf16, #tpu.memory_space<vmem>>, %arg5: memref<1x128xf32, #tpu.memory_space<vmem>>, %arg6: memref<128x128xf32, #tpu.memory_space<vmem>>) attributes {dimension_semantics = [#tpu.dimension_semantics<parallel>], iteration_bounds = array<i64: 1>, scalar_prefetch = 0 : i64, scratch_operands = 0 : i64, tpu.core_type = #tpu.core_type<tc>, window_params = [{transform_indices = @transform_0, window_bounds = array<i64: 1>}, {transform_indices = @transform_1, window_bounds = array<i64: 1>}, {transform_indices = @transform_2, window_bounds = array<i64: 128, 128>}, {pipeline_mode = #tpu.pipeline_mode<synchronous>, transform_indices = @transform_3, window_bounds = array<i64: 1, 128, 128>}, {pipeline_mode = #tpu.pipeline_mode<synchronous>, transform_indices = @transform_4, window_bounds = array<i64: 1, 128>}, {transform_indices = @transform_5, window_bounds = array<i64: 128, 128>}]} {
    %c128_i32 = arith.constant 128 : i32
    %0 = arith.muli %arg0, %c128_i32 : i32
    %c0 = arith.constant 0 : index
    %1 = memref.load %arg1[%c0] : memref<1xi32, #tpu.memory_space<smem>>
    %c0_0 = arith.constant 0 : index
    %2 = memref.load %arg2[%c0_0] : memref<1xf32, #tpu.memory_space<smem>>
    %c0_1 = arith.constant 0 : index
    %c0_2 = arith.constant 0 : index
    %3 = vector.load %arg3[%c0_1, %c0_2] : memref<128x128xbf16, #tpu.memory_space<vmem>>, vector<128x128xbf16>
    %4 = arith.extf %3 : vector<128x128xbf16> to vector<128x128xf32>
    %cst = arith.constant 0.000000e+00 : f32
    %5 = vector.broadcast %cst : f32 to vector<128x128xf32>
    %c0_3 = arith.constant 0 : index
    %c0_4 = arith.constant 0 : index
    %6 = vector.load %arg5[%c0_3, %c0_4] : memref<1x128xf32, #tpu.memory_space<vmem>>, vector<1x128xf32>
    %7 = vector.broadcast %6 : vector<1x128xf32> to vector<128x128xf32>
    %8 = arith.addf %5, %7 : vector<128x128xf32>
    %9 = tpu.iota {dimensions = array<i32: 0>} : vector<128x128xi32>
    %10 = vector.broadcast %0 : i32 to vector<128x128xi32>
    %11 = arith.addi %9, %10 : vector<128x128xi32>
    %12 = tpu.iota {dimensions = array<i32: 1>} : vector<128x128xi32>
    %c0_i32 = arith.constant 0 : i32
    %13 = arith.addi %1, %c0_i32 : i32
    %c-2048144777_i32 = arith.constant -2048144777 : i32
    %14 = vector.broadcast %c-2048144777_i32 : i32 to vector<128x128xi32>
    %15 = arith.muli %11, %14 : vector<128x128xi32>
    %16 = vector.broadcast %13 : i32 to vector<128x128xi32>
    %17 = arith.xori %16, %15 : vector<128x128xi32>
    %c-1028477379_i32 = arith.constant -1028477379 : i32
    %18 = vector.broadcast %c-1028477379_i32 : i32 to vector<128x128xi32>
    %19 = arith.muli %12, %18 : vector<128x128xi32>
    %20 = arith.xori %17, %19 : vector<128x128xi32>
    %c16_i32 = arith.constant 16 : i32
    %21 = vector.broadcast %c16_i32 : i32 to vector<128x128xi32>
    %22 = arith.shrui %20, %21 : vector<128x128xi32>
    %23 = arith.xori %20, %22 : vector<128x128xi32>
    %c2146121005_i32 = arith.constant 2146121005 : i32
    %24 = vector.broadcast %c2146121005_i32 : i32 to vector<128x128xi32>
    %25 = arith.muli %23, %24 : vector<128x128xi32>
    %c15_i32 = arith.constant 15 : i32
    %26 = vector.broadcast %c15_i32 : i32 to vector<128x128xi32>
    %27 = arith.shrui %25, %26 : vector<128x128xi32>
    %28 = arith.xori %25, %27 : vector<128x128xi32>
    %c-2073254261_i32 = arith.constant -2073254261 : i32
    %29 = vector.broadcast %c-2073254261_i32 : i32 to vector<128x128xi32>
    %30 = arith.muli %28, %29 : vector<128x128xi32>
    %c16_i32_5 = arith.constant 16 : i32
    %31 = vector.broadcast %c16_i32_5 : i32 to vector<128x128xi32>
    %32 = arith.shrui %30, %31 : vector<128x128xi32>
    %33 = arith.xori %30, %32 : vector<128x128xi32>
    %c8_i32 = arith.constant 8 : i32
    %34 = vector.broadcast %c8_i32 : i32 to vector<128x128xi32>
    %35 = arith.shrui %33, %34 : vector<128x128xi32>
    %36 = arith.sitofp %35 : vector<128x128xi32> to vector<128x128xf32>
    %cst_6 = arith.constant 5.96046448E-8 : f32
    %37 = vector.broadcast %cst_6 : f32 to vector<128x128xf32>
    %38 = arith.mulf %36, %37 : vector<128x128xf32>
    %cst_7 = arith.constant 9.99999997E-7 : f32
    %cst_8 = arith.constant 0.999998986 : f32
    %39 = vector.broadcast %cst_7 : f32 to vector<128x128xf32>
    %40 = arith.maximumf %39, %38 : vector<128x128xf32>
    %41 = vector.broadcast %cst_8 : f32 to vector<128x128xf32>
    %42 = arith.minimumf %41, %40 : vector<128x128xf32>
    %cst_9 = arith.constant 1.000000e+00 : f32
    %43 = vector.broadcast %cst_9 : f32 to vector<128x128xf32>
    %44 = arith.subf %43, %42 : vector<128x128xf32>
    %45 = arith.divf %42, %44 : vector<128x128xf32>
    %46 = math.log %45 : vector<128x128xf32>
    %47 = vector.broadcast %2 : f32 to vector<128x128xf32>
    %48 = arith.addf %47, %46 : vector<128x128xf32>
    %cst_10 = arith.constant 1.49253726 : f32
    %49 = vector.broadcast %cst_10 : f32 to vector<128x128xf32>
    %50 = arith.mulf %48, %49 : vector<128x128xf32>
    %cst_11 = arith.constant 0.000000e+00 : f32
    %51 = vector.broadcast %cst_11 : f32 to vector<128x128xf32>
    %52 = arith.subf %51, %50 : vector<128x128xf32>
    %53 = math.exp %52 : vector<128x128xf32>
    %cst_12 = arith.constant 1.000000e+00 : f32
    %54 = vector.broadcast %cst_12 : f32 to vector<128x128xf32>
    %55 = arith.addf %54, %53 : vector<128x128xf32>
    %cst_13 = arith.constant 1.000000e+00 : f32
    %56 = vector.broadcast %cst_13 : f32 to vector<128x128xf32>
    %57 = arith.divf %56, %55 : vector<128x128xf32>
    %58 = arith.mulf %57, %4 : vector<128x128xf32>
    %59 = arith.truncf %58 : vector<128x128xf32> to vector<128x128xbf16>
    %c0_14 = arith.constant 0 : index
    %c0_15 = arith.constant 0 : index
    %c0_16 = arith.constant 0 : index
    %60 = vector.load %arg4[%c0_14, %c0_15, %c0_16] : memref<1x128x128xbf16, #tpu.memory_space<vmem>>, vector<1x128x128xbf16>
    %61 = vector.shape_cast %60 : vector<1x128x128xbf16> to vector<128x128xbf16>
    %cst_17 = arith.constant dense<0.000000e+00> : vector<128x128xf32>
    %62 = tpu.matmul %59, %61, %cst_17 {dimension_numbers = #tpu.dot_dimension_numbers<[1], [0], [0], [1], [0, 0, 1, 1], [], []>} : vector<128x128xbf16>, vector<128x128xbf16>, vector<128x128xf32> -> vector<128x128xf32>
    %63 = arith.addf %8, %62 : vector<128x128xf32>
    %cst_18 = arith.constant 0.000000e+00 : f32
    %64 = vector.broadcast %cst_18 : f32 to vector<128x128xf32>
    %65 = arith.maximumf %63, %64 : vector<128x128xf32>
    %66 = tpu.iota {dimensions = array<i32: 0>} : vector<128x128xi32>
    %67 = vector.broadcast %0 : i32 to vector<128x128xi32>
    %68 = arith.addi %66, %67 : vector<128x128xi32>
    %69 = tpu.iota {dimensions = array<i32: 1>} : vector<128x128xi32>
    %c1013904242_i32 = arith.constant 1013904242 : i32
    %70 = arith.addi %1, %c1013904242_i32 : i32
    %c-2048144777_i32_19 = arith.constant -2048144777 : i32
    %71 = vector.broadcast %c-2048144777_i32_19 : i32 to vector<128x128xi32>
    %72 = arith.muli %68, %71 : vector<128x128xi32>
    %73 = vector.broadcast %70 : i32 to vector<128x128xi32>
    %74 = arith.xori %73, %72 : vector<128x128xi32>
    %c-1028477379_i32_20 = arith.constant -1028477379 : i32
    %75 = vector.broadcast %c-1028477379_i32_20 : i32 to vector<128x128xi32>
    %76 = arith.muli %69, %75 : vector<128x128xi32>
    %77 = arith.xori %74, %76 : vector<128x128xi32>
    %c16_i32_21 = arith.constant 16 : i32
    %78 = vector.broadcast %c16_i32_21 : i32 to vector<128x128xi32>
    %79 = arith.shrui %77, %78 : vector<128x128xi32>
    %80 = arith.xori %77, %79 : vector<128x128xi32>
    %c2146121005_i32_22 = arith.constant 2146121005 : i32
    %81 = vector.broadcast %c2146121005_i32_22 : i32 to vector<128x128xi32>
    %82 = arith.muli %80, %81 : vector<128x128xi32>
    %c15_i32_23 = arith.constant 15 : i32
    %83 = vector.broadcast %c15_i32_23 : i32 to vector<128x128xi32>
    %84 = arith.shrui %82, %83 : vector<128x128xi32>
    %85 = arith.xori %82, %84 : vector<128x128xi32>
    %c-2073254261_i32_24 = arith.constant -2073254261 : i32
    %86 = vector.broadcast %c-2073254261_i32_24 : i32 to vector<128x128xi32>
    %87 = arith.muli %85, %86 : vector<128x128xi32>
    %c16_i32_25 = arith.constant 16 : i32
    %88 = vector.broadcast %c16_i32_25 : i32 to vector<128x128xi32>
    %89 = arith.shrui %87, %88 : vector<128x128xi32>
    %90 = arith.xori %87, %89 : vector<128x128xi32>
    %c8_i32_26 = arith.constant 8 : i32
    %91 = vector.broadcast %c8_i32_26 : i32 to vector<128x128xi32>
    %92 = arith.shrui %90, %91 : vector<128x128xi32>
    %93 = arith.sitofp %92 : vector<128x128xi32> to vector<128x128xf32>
    %cst_27 = arith.constant 5.96046448E-8 : f32
    %94 = vector.broadcast %cst_27 : f32 to vector<128x128xf32>
    %95 = arith.mulf %93, %94 : vector<128x128xf32>
    %cst_28 = arith.constant 9.99999997E-7 : f32
    %cst_29 = arith.constant 0.999998986 : f32
    %96 = vector.broadcast %cst_28 : f32 to vector<128x128xf32>
    %97 = arith.maximumf %96, %95 : vector<128x128xf32>
    %98 = vector.broadcast %cst_29 : f32 to vector<128x128xf32>
    %99 = arith.minimumf %98, %97 : vector<128x128xf32>
    %cst_30 = arith.constant 5.000000e-01 : f32
    %100 = vector.broadcast %cst_30 : f32 to vector<128x128xf32>
    %101 = arith.cmpf olt, %99, %100 : vector<128x128xf32>
    %cst_31 = arith.constant 2.000000e+00 : f32
    %102 = vector.broadcast %cst_31 : f32 to vector<128x128xf32>
    %103 = arith.mulf %65, %102 : vector<128x128xf32>
    %cst_32 = arith.constant 0.000000e+00 : f32
    %104 = vector.broadcast %cst_32 : f32 to vector<128x128xf32>
    %105 = arith.select %101, %103, %104 : vector<128x128xi1>, vector<128x128xf32>
    %c0_33 = arith.constant 0 : index
    %c0_34 = arith.constant 0 : index
    %106 = vector.load %arg6[%c0_33, %c0_34] : memref<128x128xf32, #tpu.memory_space<vmem>>, vector<128x128xf32>
    tpu.vector_store %arg6[%c0_33, %c0_34], %105 {strides = array<i32>} : memref<128x128xf32, #tpu.memory_space<vmem>>, vector<128x128xf32>,
    return
  }
  func.func @transform_0(%arg0: i32) -> i32 {
    %c0_i32 = arith.constant 0 : i32
    %c0_i32_0 = arith.constant 0 : i32
    return %c0_i32 : i32
  }
  func.func @transform_1(%arg0: i32) -> i32 {
    %c0_i32 = arith.constant 0 : i32
    %c0_i32_0 = arith.constant 0 : i32
    return %c0_i32 : i32
  }
  func.func @transform_2(%arg0: i32) -> (i32, i32) {
    %c0_i32 = arith.constant 0 : i32
    %c0_i32_0 = arith.constant 0 : i32
    return %arg0, %c0_i32 : i32, i32
  }
  func.func @transform_3(%arg0: i32) -> (i32, i32, i32) {
    %c0_i32 = arith.constant 0 : i32
    %c0_i32_0 = arith.constant 0 : i32
    %c0_i32_1 = arith.constant 0 : i32
    %c0_i32_2 = arith.constant 0 : i32
    return %c0_i32, %c0_i32_0, %c0_i32_1 : i32, i32, i32
  }
  func.func @transform_4(%arg0: i32) -> (i32, i32) {
    %c0_i32 = arith.constant 0 : i32
    %c0_i32_0 = arith.constant 0 : i32
    %c0_i32_1 = arith.constant 0 : i32
    return %c0_i32, %c0_i32_0 : i32, i32
  }
  func.func @transform_5(%arg0: i32) -> (i32, i32) {
    %c0_i32 = arith.constant 0 : i32
    %c0_i32_0 = arith.constant 0 : i32
    return %arg0, %c0_i32 : i32, i32
  }
}

</mosaic_0001>

<llo_original>
// kernel: tpu_custom_call.1
$region0: #{tpu_custom_call.1}
  #allocation0 [shape = 'u32[]', space=smem, size = 0x4, offset = 0x4, fixed_abs, tag = 'smem constant byte address 0x4 - core index']
  #allocation1 [shape = 'u32[144,128]{1,0:T(1,128)}', space=vmem, size = 0x12000, scoped, tag = 'internal scratch']
  #allocation2 [shape = 's32[1]{0:T(128)S(6)}', space=smem, size = 0x200, scoped, tag = 'scoped memory for tpu_custom_call.1']
  #allocation3 [shape = 'f32[1]{0:T(128)S(6)}', space=smem, size = 0x200, scoped, tag = 'scoped memory for tpu_custom_call.1']
  %s0 = inlined_call_operand.<no memory space> [shape: s32[1], index: 0, kind: input, shape index: {}]
  %s1 = inlined_call_operand.<no memory space> [shape: f32[1], index: 1, kind: input, shape index: {}]
  %s2 = inlined_call_operand.hbm [shape: bf16[128,128], index: 2, kind: input, shape index: {}]
  %s3 = inlined_call_operand.hbm [shape: bf16[1,128,128], index: 3, kind: input, shape index: {}]
  %s4 = inlined_call_operand.vmem [shape: f32[1,128], index: 4, kind: input, shape index: {}]
  %s5 = inlined_call_operand.hbm [shape: f32[128,128], index: 5, kind: output, shape index: {}]
  %s6 = sld [smem:[#allocation0]]
  $region38: #{tpu_custom_call.1} parent=0
    _
  %s8 = ssub.s32 1, %s6
  %s9 = scalar_select 0, %s8, %s6
  %10 = sst [smem:[#allocation2]] %s0
  %11 = sst [smem:[#allocation3]] %s1
  $region1: #{tpu_custom_call.1} parent=0
    #allocation4 [shape = 'u8[32768]{0}', space=vmem, size = 0x8000, scoped, tag = 'input window, operand 2, single buffered']
    #allocation5 [shape = 's32[1]{0}', space=sflag, size = 0x4, scoped, tag = 'scoped memory for tpu_custom_call.1']
    #allocation6 [shape = 's32[1]{0}', space=sflag, size = 0x4, scoped, tag = 'scoped memory for tpu_custom_call.1']
    #allocation7 [shape = 'u8[32768]{0}', space=vmem, size = 0x8000, scoped, tag = 'input window, operand 3, single buffered']
    #allocation8 [shape = 's32[1]{0}', space=sflag, size = 0x4, scoped, tag = 'scoped memory for tpu_custom_call.1']
    #allocation9 [shape = 'u8[65536]{0}', space=vmem, size = 0x10000, scoped, tag = 'output window, operand 0, single buffered']
    %12 = vsyncpa [#allocation5], 0
    %13 = vsyncpa [#allocation8], 0
    %14 = vsyncpa [#allocation6], 0
    // Predicated region
    $region2: #{tpu_custom_call.1} parent=1 // pred_check
      _
    $region3: #{tpu_custom_call.1} parent=1 // pred_check_branch
      %16 = sbr.rel (0) target = $region5
    $region4: #{tpu_custom_call.1} parent=1 // pred_region
      _
    $region5: #{tpu_custom_call.1} parent=1 // pred_fallthru
      _
    // Predicated region
    $region6: #{tpu_custom_call.1} parent=1 // pred_check
      _
    $region7: #{tpu_custom_call.1} parent=1 // pred_check_branch
      %18 = sbr.rel (0) target = $region9
    $region8: #{tpu_custom_call.1} parent=1 // pred_region
      _
    $region9: #{tpu_custom_call.1} parent=1 // pred_fallthru
      _
    // Predicated region
    $region10: #{tpu_custom_call.1} parent=1 // pred_check
      _
    $region11: #{tpu_custom_call.1} parent=1 // pred_check_branch
      %20 = sbr.rel (0) target = $region13
    $region12: #{tpu_custom_call.1} parent=1 // pred_region
      %s22 = ssub.s32 1024, 1024
      %23 = vsyncadd [#allocation5], %s22
      %s24 = sshll.u32 [#allocation4], 4
      %s25 = int_to_ptr.vmem [resolvable:$true] %s24
      %30 = dma.hbm_to_vmem [thread:$0]  %s2, 1024, %s25, [#allocation5], 64, 64, 4
    $region13: #{tpu_custom_call.1} parent=1 // pred_fallthru
      _
    // Predicated region
    $region14: #{tpu_custom_call.1} parent=1 // pred_check
      _
    $region15: #{tpu_custom_call.1} parent=1 // pred_check_branch
      %32 = sbr.rel (0) target = $region17
    $region16: #{tpu_custom_call.1} parent=1 // pred_region
      %s34 = ssub.s32 1024, 1024
      %35 = vsyncadd [#allocation8], %s34
      %s36 = sshll.u32 [#allocation7], 4
      %s37 = int_to_ptr.vmem [resolvable:$true] %s36
      %42 = dma.hbm_to_vmem [thread:$0]  %s3, 1024, %s37, [#allocation8], 64, 64, 4
    $region17: #{tpu_custom_call.1} parent=1 // pred_fallthru
      _
    // Predicated region
    $region18: #{tpu_custom_call.1} parent=1 // pred_check
      _
    $region19: #{tpu_custom_call.1} parent=1 // pred_check_branch
      %44 = sbr.rel (0) target = $region21
    $region20: #{tpu_custom_call.1} parent=1 // pred_region
      _
    $region21: #{tpu_custom_call.1} parent=1 // pred_fallthru
      _
    // Predicated region
    $region22: #{tpu_custom_call.1} parent=1 // pred_check
      _
    $region23: #{tpu_custom_call.1} parent=1 // pred_check_branch
      %46 = sbr.rel (0) target = $region25
    $region24: #{tpu_custom_call.1} parent=1 // pred_region
      %47 = dma.done [#allocation5], 1024
    $region25: #{tpu_custom_call.1} parent=1 // pred_fallthru
      _
    // Predicated region
    $region26: #{tpu_custom_call.1} parent=1 // pred_check
      _
    $region27: #{tpu_custom_call.1} parent=1 // pred_check_branch
      %49 = sbr.rel (0) target = $region29
    $region28: #{tpu_custom_call.1} parent=1 // pred_region
      %50 = dma.done [#allocation8], 1024
    $region29: #{tpu_custom_call.1} parent=1 // pred_fallthru
      _
    %s52 = smul.u32 0, 128
    %s53 = sld [smem:[#allocation2]]
    %s54 = sld [smem:[#allocation3]]
    %v55 = vld [vmem:[#allocation4] sm:$0xf]
    %v56 = vld [vmem:[#allocation4 + $0x4] sm:$0xf]
    %v57 = vld [vmem:[#allocation4 + $0x8] sm:$0xf]
    %v58 = vld [vmem:[#allocation4 + $0xc] sm:$0xf]
    %v59 = vld [vmem:[#allocation4 + $0x10] sm:$0xf]
    %v60 = vld [vmem:[#allocation4 + $0x14] sm:$0xf]
    %v61 = vld [vmem:[#allocation4 + $0x18] sm:$0xf]
    %v62 = vld [vmem:[#allocation4 + $0x1c] sm:$0xf]
    %v63 = vld [vmem:[#allocation4 + $0x20] sm:$0xf]
    %v64 = vld [vmem:[#allocation4 + $0x24] sm:$0xf]
    %v65 = vld [vmem:[#allocation4 + $0x28] sm:$0xf]
    %v66 = vld [vmem:[#allocation4 + $0x2c] sm:$0xf]
    %v67 = vld [vmem:[#allocation4 + $0x30] sm:$0xf]
    %v68 = vld [vmem:[#allocation4 + $0x34] sm:$0xf]
    %v69 = vld [vmem:[#allocation4 + $0x38] sm:$0xf]
    %v70 = vld [vmem:[#allocation4 + $0x3c] sm:$0xf]
    %v71 = vunpack.c.l.bf16 %v55
    %v72 = vunpack.c.l.bf16 %v56
    %v73 = vunpack.c.l.bf16 %v57
    %v74 = vunpack.c.l.bf16 %v58
    %v75 = vunpack.c.l.bf16 %v59
    %v76 = vunpack.c.l.bf16 %v60
    %v77 = vunpack.c.l.bf16 %v61
    %v78 = vunpack.c.l.bf16 %v62
    %v79 = vunpack.c.l.bf16 %v63
    %v80 = vunpack.c.l.bf16 %v64
    %v81 = vunpack.c.l.bf16 %v65
    %v82 = vunpack.c.l.bf16 %v66
    %v83 = vunpack.c.l.bf16 %v67
    %v84 = vunpack.c.l.bf16 %v68
    %v85 = vunpack.c.l.bf16 %v69
    %v86 = vunpack.c.l.bf16 %v70
    %v87 = vld [vmem:[%s4] sm:$0x1]
    %v89 = vlaneseq
    %v90 = vshrl.u32 %v89, 7
    %v91 = vsub.s32 0, %v90
    %v92 = vrot.slane %v87, %v91
    %v94 = vadd.f32 %v92, 0.0
    %v95 = vlaneseq
    %v96 = vshrl.u32 %v95, 7
    %v97 = vadd.s32 %v96, 8
    %v98 = vadd.s32 %v96, 16
    %v99 = vadd.s32 %v96, 24
    %v100 = vadd.s32 %v96, 32
    %v101 = vadd.s32 %v96, 40
    %v102 = vadd.s32 %v96, 48
    %v103 = vadd.s32 %v96, 56
    %v104 = vadd.s32 %v96, 64
    %v105 = vadd.s32 %v96, 72
    %v106 = vadd.s32 %v96, 80
    %v107 = vadd.s32 %v96, 88
    %v108 = vadd.s32 %v96, 96
    %v109 = vadd.s32 %v96, 104
    %v110 = vadd.s32 %v96, 112
    %v111 = vadd.s32 %v96, 120
    %v112 = vstv %s52
    %v113 = vadd.s32 %v96, %v112
    %v114 = vadd.s32 %v97, %v112
    %v115 = vadd.s32 %v98, %v112
    %v116 = vadd.s32 %v99, %v112
    %v117 = vadd.s32 %v100, %v112
    %v118 = vadd.s32 %v101, %v112
    %v119 = vadd.s32 %v102, %v112
    %v120 = vadd.s32 %v103, %v112
    %v121 = vadd.s32 %v104, %v112
    %v122 = vadd.s32 %v105, %v112
    %v123 = vadd.s32 %v106, %v112
    %v124 = vadd.s32 %v107, %v112
    %v125 = vadd.s32 %v108, %v112
    %v126 = vadd.s32 %v109, %v112
    %v127 = vadd.s32 %v110, %v112
    %v128 = vadd.s32 %v111, %v112
    %v129 = vlaneseq
    %v130 = vand.u32 %v129, 127
    %v131 = vmul.u32 %v113, 2246822519
    %v132 = vmul.u32 %v114, 2246822519
    %v133 = vmul.u32 %v115, 2246822519
    %v134 = vmul.u32 %v116, 2246822519
    %v135 = vmul.u32 %v117, 2246822519
    %v136 = vmul.u32 %v118, 2246822519
    %v137 = vmul.u32 %v119, 2246822519
    %v138 = vmul.u32 %v120, 2246822519
    %v139 = vmul.u32 %v121, 2246822519
    %v140 = vmul.u32 %v122, 2246822519
    %v141 = vmul.u32 %v123, 2246822519
    %v142 = vmul.u32 %v124, 2246822519
    %v143 = vmul.u32 %v125, 2246822519
    %v144 = vmul.u32 %v126, 2246822519
    %v145 = vmul.u32 %v127, 2246822519
    %v146 = vmul.u32 %v128, 2246822519
    %v147 = vstv %s53
    %v148 = vxor.u32 %v147, %v131
    %v149 = vxor.u32 %v147, %v132
    %v150 = vxor.u32 %v147, %v133
    %v151 = vxor.u32 %v147, %v134
    %v152 = vxor.u32 %v147, %v135
    %v153 = vxor.u32 %v147, %v136
    %v154 = vxor.u32 %v147, %v137
    %v155 = vxor.u32 %v147, %v138
    %v156 = vxor.u32 %v147, %v139
    %v157 = vxor.u32 %v147, %v140
    %v158 = vxor.u32 %v147, %v141
    %v159 = vxor.u32 %v147, %v142
    %v160 = vxor.u32 %v147, %v143
    %v161 = vxor.u32 %v147, %v144
    %v162 = vxor.u32 %v147, %v145
    %v163 = vxor.u32 %v147, %v146
    %v164 = vmul.u32 %v130, 3266489917
    %v165 = vxor.u32 %v148, %v164
    %v166 = vxor.u32 %v149, %v164
    %v167 = vxor.u32 %v150, %v164
    %v168 = vxor.u32 %v151, %v164
    %v169 = vxor.u32 %v152, %v164
    %v170 = vxor.u32 %v153, %v164
    %v171 = vxor.u32 %v154, %v164
    %v172 = vxor.u32 %v155, %v164
    %v173 = vxor.u32 %v156, %v164
    %v174 = vxor.u32 %v157, %v164
    %v175 = vxor.u32 %v158, %v164
    %v176 = vxor.u32 %v159, %v164
    %v177 = vxor.u32 %v160, %v164
    %v178 = vxor.u32 %v161, %v164
    %v179 = vxor.u32 %v162, %v164
    %v180 = vxor.u32 %v163, %v164
    %v181 = vshrl.u32 %v165, 16
    %v182 = vshrl.u32 %v166, 16
    %v183 = vshrl.u32 %v167, 16
    %v184 = vshrl.u32 %v168, 16
    %v185 = vshrl.u32 %v169, 16
    %v186 = vshrl.u32 %v170, 16
    %v187 = vshrl.u32 %v171, 16
    %v188 = vshrl.u32 %v172, 16
    %v189 = vshrl.u32 %v173, 16
    %v190 = vshrl.u32 %v174, 16
    %v191 = vshrl.u32 %v175, 16
    %v192 = vshrl.u32 %v176, 16
    %v193 = vshrl.u32 %v177, 16
    %v194 = vshrl.u32 %v178, 16
    %v195 = vshrl.u32 %v179, 16
    %v196 = vshrl.u32 %v180, 16
    %v197 = vxor.u32 %v165, %v181
    %v198 = vxor.u32 %v166, %v182
    %v199 = vxor.u32 %v167, %v183
    %v200 = vxor.u32 %v168, %v184
    %v201 = vxor.u32 %v169, %v185
    %v202 = vxor.u32 %v170, %v186
    %v203 = vxor.u32 %v171, %v187
    %v204 = vxor.u32 %v172, %v188
    %v205 = vxor.u32 %v173, %v189
    %v206 = vxor.u32 %v174, %v190
    %v207 = vxor.u32 %v175, %v191
    %v208 = vxor.u32 %v176, %v192
    %v209 = vxor.u32 %v177, %v193
    %v210 = vxor.u32 %v178, %v194
    %v211 = vxor.u32 %v179, %v195
    %v212 = vxor.u32 %v180, %v196
    %v213 = vmul.u32 %v197, 2146121005
    %v214 = vmul.u32 %v198, 2146121005
    %v215 = vmul.u32 %v199, 2146121005
    %v216 = vmul.u32 %v200, 2146121005
    %v217 = vmul.u32 %v201, 2146121005
    %v218 = vmul.u32 %v202, 2146121005
    %v219 = vmul.u32 %v203, 2146121005
    %v220 = vmul.u32 %v204, 2146121005
    %v221 = vmul.u32 %v205, 2146121005
    %v222 = vmul.u32 %v206, 2146121005
    %v223 = vmul.u32 %v207, 2146121005
    %v224 = vmul.u32 %v208, 2146121005
    %v225 = vmul.u32 %v209, 2146121005
    %v226 = vmul.u32 %v210, 2146121005
    %v227 = vmul.u32 %v211, 2146121005
    %v228 = vmul.u32 %v212, 2146121005
    %v229 = vshrl.u32 %v213, 15
    %v230 = vshrl.u32 %v214, 15
    %v231 = vshrl.u32 %v215, 15
    %v232 = vshrl.u32 %v216, 15
    %v233 = vshrl.u32 %v217, 15
    %v234 = vshrl.u32 %v218, 15
    %v235 = vshrl.u32 %v219, 15
    %v236 = vshrl.u32 %v220, 15
    %v237 = vshrl.u32 %v221, 15
    %v238 = vshrl.u32 %v222, 15
    %v239 = vshrl.u32 %v223, 15
    %v240 = vshrl.u32 %v224, 15
    %v241 = vshrl.u32 %v225, 15
    %v242 = vshrl.u32 %v226, 15
    %v243 = vshrl.u32 %v227, 15
    %v244 = vshrl.u32 %v228, 15
    %v245 = vxor.u32 %v213, %v229
    %v246 = vxor.u32 %v214, %v230
    %v247 = vxor.u32 %v215, %v231
    %v248 = vxor.u32 %v216, %v232
    %v249 = vxor.u32 %v217, %v233
    %v250 = vxor.u32 %v218, %v234
    %v251 = vxor.u32 %v219, %v235
    %v252 = vxor.u32 %v220, %v236
    %v253 = vxor.u32 %v221, %v237
    %v254 = vxor.u32 %v222, %v238
    %v255 = vxor.u32 %v223, %v239
    %v256 = vxor.u32 %v224, %v240
    %v257 = vxor.u32 %v225, %v241
    %v258 = vxor.u32 %v226, %v242
    %v259 = vxor.u32 %v227, %v243
    %v260 = vxor.u32 %v228, %v244
    %v261 = vmul.u32 %v245, 2221713035
    %v262 = vmul.u32 %v246, 2221713035
    %v263 = vmul.u32 %v247, 2221713035
    %v264 = vmul.u32 %v248, 2221713035
    %v265 = vmul.u32 %v249, 2221713035
    %v266 = vmul.u32 %v250, 2221713035
    %v267 = vmul.u32 %v251, 2221713035
    %v268 = vmul.u32 %v252, 2221713035
    %v269 = vmul.u32 %v253, 2221713035
    %v270 = vmul.u32 %v254, 2221713035
    %v271 = vmul.u32 %v255, 2221713035
    %v272 = vmul.u32 %v256, 2221713035
    %v273 = vmul.u32 %v257, 2221713035
    %v274 = vmul.u32 %v258, 2221713035
    %v275 = vmul.u32 %v259, 2221713035
    %v276 = vmul.u32 %v260, 2221713035
    %v277 = vshrl.u32 %v261, 16
    %v278 = vshrl.u32 %v262, 16
    %v279 = vshrl.u32 %v263, 16
    %v280 = vshrl.u32 %v264, 16
    %v281 = vshrl.u32 %v265, 16
    %v282 = vshrl.u32 %v266, 16
    %v283 = vshrl.u32 %v267, 16
    %v284 = vshrl.u32 %v268, 16
    %v285 = vshrl.u32 %v269, 16
    %v286 = vshrl.u32 %v270, 16
    %v287 = vshrl.u32 %v271, 16
    %v288 = vshrl.u32 %v272, 16
    %v289 = vshrl.u32 %v273, 16
    %v290 = vshrl.u32 %v274, 16
    %v291 = vshrl.u32 %v275, 16
    %v292 = vshrl.u32 %v276, 16
    %v293 = vxor.u32 %v261, %v277
    %v294 = vxor.u32 %v262, %v278
    %v295 = vxor.u32 %v263, %v279
    %v296 = vxor.u32 %v264, %v280
    %v297 = vxor.u32 %v265, %v281
    %v298 = vxor.u32 %v266, %v282
    %v299 = vxor.u32 %v267, %v283
    %v300 = vxor.u32 %v268, %v284
    %v301 = vxor.u32 %v269, %v285
    %v302 = vxor.u32 %v270, %v286
    %v303 = vxor.u32 %v271, %v287
    %v304 = vxor.u32 %v272, %v288
    %v305 = vxor.u32 %v273, %v289
    %v306 = vxor.u32 %v274, %v290
    %v307 = vxor.u32 %v275, %v291
    %v308 = vxor.u32 %v276, %v292
    %v309 = vshrl.u32 %v293, 8
    %v310 = vshrl.u32 %v294, 8
    %v311 = vshrl.u32 %v295, 8
    %v312 = vshrl.u32 %v296, 8
    %v313 = vshrl.u32 %v297, 8
    %v314 = vshrl.u32 %v298, 8
    %v315 = vshrl.u32 %v299, 8
    %v316 = vshrl.u32 %v300, 8
    %v317 = vshrl.u32 %v301, 8
    %v318 = vshrl.u32 %v302, 8
    %v319 = vshrl.u32 %v303, 8
    %v320 = vshrl.u32 %v304, 8
    %v321 = vshrl.u32 %v305, 8
    %v322 = vshrl.u32 %v306, 8
    %v323 = vshrl.u32 %v307, 8
    %v324 = vshrl.u32 %v308, 8
    %v325 = vcvt.s32.f32 %v309
    %v326 = vcvt.s32.f32 %v310
    %v327 = vcvt.s32.f32 %v311
    %v328 = vcvt.s32.f32 %v312
    %v329 = vcvt.s32.f32 %v313
    %v330 = vcvt.s32.f32 %v314
    %v331 = vcvt.s32.f32 %v315
    %v332 = vcvt.s32.f32 %v316
    %v333 = vcvt.s32.f32 %v317
    %v334 = vcvt.s32.f32 %v318
    %v335 = vcvt.s32.f32 %v319
    %v336 = vcvt.s32.f32 %v320
    %v337 = vcvt.s32.f32 %v321
    %v338 = vcvt.s32.f32 %v322
    %v339 = vcvt.s32.f32 %v323
    %v340 = vcvt.s32.f32 %v324
    %v341 = vmul.f32 %v325, 5.9604645e-08
    %v342 = vmul.f32 %v326, 5.9604645e-08
    %v343 = vmul.f32 %v327, 5.9604645e-08
    %v344 = vmul.f32 %v328, 5.9604645e-08
    %v345 = vmul.f32 %v329, 5.9604645e-08
    %v346 = vmul.f32 %v330, 5.9604645e-08
    %v347 = vmul.f32 %v331, 5.9604645e-08
    %v348 = vmul.f32 %v332, 5.9604645e-08
    %v349 = vmul.f32 %v333, 5.9604645e-08
    %v350 = vmul.f32 %v334, 5.9604645e-08
    %v351 = vmul.f32 %v335, 5.9604645e-08
    %v352 = vmul.f32 %v336, 5.9604645e-08
    %v353 = vmul.f32 %v337, 5.9604645e-08
    %v354 = vmul.f32 %v338, 5.9604645e-08
    %v355 = vmul.f32 %v339, 5.9604645e-08
    %v356 = vmul.f32 %v340, 5.9604645e-08
    %v357 = vmax.f32 %v341, 1e-06
    %v358 = vmax.f32 %v342, 1e-06
    %v359 = vmax.f32 %v343, 1e-06
    %v360 = vmax.f32 %v344, 1e-06
    %v361 = vmax.f32 %v345, 1e-06
    %v362 = vmax.f32 %v346, 1e-06
    %v363 = vmax.f32 %v347, 1e-06
    %v364 = vmax.f32 %v348, 1e-06
    %v365 = vmax.f32 %v349, 1e-06
    %v366 = vmax.f32 %v350, 1e-06
    %v367 = vmax.f32 %v351, 1e-06
    %v368 = vmax.f32 %v352, 1e-06
    %v369 = vmax.f32 %v353, 1e-06
    %v370 = vmax.f32 %v354, 1e-06
    %v371 = vmax.f32 %v355, 1e-06
    %v372 = vmax.f32 %v356, 1e-06
    %v373 = vmin.f32 %v357, 0.999999
    %v374 = vmin.f32 %v358, 0.999999
    %v375 = vmin.f32 %v359, 0.999999
    %v376 = vmin.f32 %v360, 0.999999
    %v377 = vmin.f32 %v361, 0.999999
    %v378 = vmin.f32 %v362, 0.999999
    %v379 = vmin.f32 %v363, 0.999999
    %v380 = vmin.f32 %v364, 0.999999
    %v381 = vmin.f32 %v365, 0.999999
    %v382 = vmin.f32 %v366, 0.999999
    %v383 = vmin.f32 %v367, 0.999999
    %v384 = vmin.f32 %v368, 0.999999
    %v385 = vmin.f32 %v369, 0.999999
    %v386 = vmin.f32 %v370, 0.999999
    %v387 = vmin.f32 %v371, 0.999999
    %v388 = vmin.f32 %v372, 0.999999
    %v389 = vsub.f32 1.0, %v373
    %v390 = vsub.f32 1.0, %v374
    %v391 = vsub.f32 1.0, %v375
    %v392 = vsub.f32 1.0, %v376
    %v393 = vsub.f32 1.0, %v377
    %v394 = vsub.f32 1.0, %v378
    %v395 = vsub.f32 1.0, %v379
    %v396 = vsub.f32 1.0, %v380
    %v397 = vsub.f32 1.0, %v381
    %v398 = vsub.f32 1.0, %v382
    %v399 = vsub.f32 1.0, %v383
    %v400 = vsub.f32 1.0, %v384
    %v401 = vsub.f32 1.0, %v385
    %v402 = vsub.f32 1.0, %v386
    %v403 = vsub.f32 1.0, %v387
    %v404 = vsub.f32 1.0, %v388
    %v405 = vrcp.pop %v389
    %v406 = vmul.f32 %v373, %v405
    %v407 = vrcp.pop %v390
    %v408 = vmul.f32 %v374, %v407
    %v409 = vrcp.pop %v391
    %v410 = vmul.f32 %v375, %v409
    %v411 = vrcp.pop %v392
    %v412 = vmul.f32 %v376, %v411
    %v413 = vrcp.pop %v393
    %v414 = vmul.f32 %v377, %v413
    %v415 = vrcp.pop %v394
    %v416 = vmul.f32 %v378, %v415
    %v417 = vrcp.pop %v395
    %v418 = vmul.f32 %v379, %v417
    %v419 = vrcp.pop %v396
    %v420 = vmul.f32 %v380, %v419
    %v421 = vrcp.pop %v397
    %v422 = vmul.f32 %v381, %v421
    %v423 = vrcp.pop %v398
    %v424 = vmul.f32 %v382, %v423
    %v425 = vrcp.pop %v399
    %v426 = vmul.f32 %v383, %v425
    %v427 = vrcp.pop %v400
    %v428 = vmul.f32 %v384, %v427
    %v429 = vrcp.pop %v401
    %v430 = vmul.f32 %v385, %v429
    %v431 = vrcp.pop %v402
    %v432 = vmul.f32 %v386, %v431
    %v433 = vrcp.pop %v403
    %v434 = vmul.f32 %v387, %v433
    %v435 = vrcp.pop %v404
    %v436 = vmul.f32 %v388, %v435
    %v437 = vlog2.pop %v406
    %v438 = vmul.f32 %v437, 0.6931472
    %v439 = vlog2.pop %v408
    %v440 = vmul.f32 %v439, 0.6931472
    %v441 = vlog2.pop %v410
    %v442 = vmul.f32 %v441, 0.6931472
    %v443 = vlog2.pop %v412
    %v444 = vmul.f32 %v443, 0.6931472
    %v445 = vlog2.pop %v414
    %v446 = vmul.f32 %v445, 0.6931472
    %v447 = vlog2.pop %v416
    %v448 = vmul.f32 %v447, 0.6931472
    %v449 = vlog2.pop %v418
    %v450 = vmul.f32 %v449, 0.6931472
    %v451 = vlog2.pop %v420
    %v452 = vmul.f32 %v451, 0.6931472
    %v453 = vlog2.pop %v422
    %v454 = vmul.f32 %v453, 0.6931472
    %v455 = vlog2.pop %v424
    %v456 = vmul.f32 %v455, 0.6931472
    %v457 = vlog2.pop %v426
    %v458 = vmul.f32 %v457, 0.6931472
    %v459 = vlog2.pop %v428
    %v460 = vmul.f32 %v459, 0.6931472
    %v461 = vlog2.pop %v430
    %v462 = vmul.f32 %v461, 0.6931472
    %v463 = vlog2.pop %v432
    %v464 = vmul.f32 %v463, 0.6931472
    %v465 = vlog2.pop %v434
    %v466 = vmul.f32 %v465, 0.6931472
    %v467 = vlog2.pop %v436
    %v468 = vmul.f32 %v467, 0.6931472
    %v469 = vstv %s54
    %v470 = vadd.f32 %v469, %v438
    %v471 = vadd.f32 %v469, %v440
    %v472 = vadd.f32 %v469, %v442
    %v473 = vadd.f32 %v469, %v444
    %v474 = vadd.f32 %v469, %v446
    %v475 = vadd.f32 %v469, %v448
    %v476 = vadd.f32 %v469, %v450
    %v477 = vadd.f32 %v469, %v452
    %v478 = vadd.f32 %v469, %v454
    %v479 = vadd.f32 %v469, %v456
    %v480 = vadd.f32 %v469, %v458
    %v481 = vadd.f32 %v469, %v460
    %v482 = vadd.f32 %v469, %v462
    %v483 = vadd.f32 %v469, %v464
    %v484 = vadd.f32 %v469, %v466
    %v485 = vadd.f32 %v469, %v468
    %v486 = vmul.f32 %v470, 1.4925373
    %v487 = vmul.f32 %v471, 1.4925373
    %v488 = vmul.f32 %v472, 1.4925373
    %v489 = vmul.f32 %v473, 1.4925373
    %v490 = vmul.f32 %v474, 1.4925373
    %v491 = vmul.f32 %v475, 1.4925373
    %v492 = vmul.f32 %v476, 1.4925373
    %v493 = vmul.f32 %v477, 1.4925373
    %v494 = vmul.f32 %v478, 1.4925373
    %v495 = vmul.f32 %v479, 1.4925373
    %v496 = vmul.f32 %v480, 1.4925373
    %v497 = vmul.f32 %v481, 1.4925373
    %v498 = vmul.f32 %v482, 1.4925373
    %v499 = vmul.f32 %v483, 1.4925373
    %v500 = vmul.f32 %v484, 1.4925373
    %v501 = vmul.f32 %v485, 1.4925373
    %v502 = vsub.f32 0.0, %v486
    %v503 = vsub.f32 0.0, %v487
    %v504 = vsub.f32 0.0, %v488
    %v505 = vsub.f32 0.0, %v489
    %v506 = vsub.f32 0.0, %v490
    %v507 = vsub.f32 0.0, %v491
    %v508 = vsub.f32 0.0, %v492
    %v509 = vsub.f32 0.0, %v493
    %v510 = vsub.f32 0.0, %v494
    %v511 = vsub.f32 0.0, %v495
    %v512 = vsub.f32 0.0, %v496
    %v513 = vsub.f32 0.0, %v497
    %v514 = vsub.f32 0.0, %v498
    %v515 = vsub.f32 0.0, %v499
    %v516 = vsub.f32 0.0, %v500
    %v517 = vsub.f32 0.0, %v501
    %v518 = vmul.f32 %v502, 1.442695
    %v519 = vpow.pop %v518
    %v520 = vmul.f32 %v503, 1.442695
    %v521 = vpow.pop %v520
    %v522 = vmul.f32 %v504, 1.442695
    %v523 = vpow.pop %v522
    %v524 = vmul.f32 %v505, 1.442695
    %v525 = vpow.pop %v524
    %v526 = vmul.f32 %v506, 1.442695
    %v527 = vpow.pop %v526
    %v528 = vmul.f32 %v507, 1.442695
    %v529 = vpow.pop %v528
    %v530 = vmul.f32 %v508, 1.442695
    %v531 = vpow.pop %v530
    %v532 = vmul.f32 %v509, 1.442695
    %v533 = vpow.pop %v532
    %v534 = vmul.f32 %v510, 1.442695
    %v535 = vpow.pop %v534
    %v536 = vmul.f32 %v511, 1.442695
    %v537 = vpow.pop %v536
    %v538 = vmul.f32 %v512, 1.442695
    %v539 = vpow.pop %v538
    %v540 = vmul.f32 %v513, 1.442695
    %v541 = vpow.pop %v540
    %v542 = vmul.f32 %v514, 1.442695
    %v543 = vpow.pop %v542
    %v544 = vmul.f32 %v515, 1.442695
    %v545 = vpow.pop %v544
    %v546 = vmul.f32 %v516, 1.442695
    %v547 = vpow.pop %v546
    %v548 = vmul.f32 %v517, 1.442695
    %v549 = vpow.pop %v548
    %v550 = vadd.f32 %v519, 1.0
    %v551 = vadd.f32 %v521, 1.0
    %v552 = vadd.f32 %v523, 1.0
    %v553 = vadd.f32 %v525, 1.0
    %v554 = vadd.f32 %v527, 1.0
    %v555 = vadd.f32 %v529, 1.0
    %v556 = vadd.f32 %v531, 1.0
    %v557 = vadd.f32 %v533, 1.0
    %v558 = vadd.f32 %v535, 1.0
    %v559 = vadd.f32 %v537, 1.0
    %v560 = vadd.f32 %v539, 1.0
    %v561 = vadd.f32 %v541, 1.0
    %v562 = vadd.f32 %v543, 1.0
    %v563 = vadd.f32 %v545, 1.0
    %v564 = vadd.f32 %v547, 1.0
    %v565 = vadd.f32 %v549, 1.0
    %v566 = vrcp.pop %v550
    %v567 = vmul.f32 1.0, %v566
    %v568 = vrcp.pop %v551
    %v569 = vmul.f32 1.0, %v568
    %v570 = vrcp.pop %v552
    %v571 = vmul.f32 1.0, %v570
    %v572 = vrcp.pop %v553
    %v573 = vmul.f32 1.0, %v572
    %v574 = vrcp.pop %v554
    %v575 = vmul.f32 1.0, %v574
    %v576 = vrcp.pop %v555
    %v577 = vmul.f32 1.0, %v576
    %v578 = vrcp.pop %v556
    %v579 = vmul.f32 1.0, %v578
    %v580 = vrcp.pop %v557
    %v581 = vmul.f32 1.0, %v580
    %v582 = vrcp.pop %v558
    %v583 = vmul.f32 1.0, %v582
    %v584 = vrcp.pop %v559
    %v585 = vmul.f32 1.0, %v584
    %v586 = vrcp.pop %v560
    %v587 = vmul.f32 1.0, %v586
    %v588 = vrcp.pop %v561
    %v589 = vmul.f32 1.0, %v588
    %v590 = vrcp.pop %v562
    %v591 = vmul.f32 1.0, %v590
    %v592 = vrcp.pop %v563
    %v593 = vmul.f32 1.0, %v592
    %v594 = vrcp.pop %v564
    %v595 = vmul.f32 1.0, %v594
    %v596 = vrcp.pop %v565
    %v597 = vmul.f32 1.0, %v596
    %v598 = vmul.f32 %v567, %v71
    %v599 = vmul.f32 %v569, %v72
    %v600 = vmul.f32 %v571, %v73
    %v601 = vmul.f32 %v573, %v74
    %v602 = vmul.f32 %v575, %v75
    %v603 = vmul.f32 %v577, %v76
    %v604 = vmul.f32 %v579, %v77
    %v605 = vmul.f32 %v581, %v78
    %v606 = vmul.f32 %v583, %v79
    %v607 = vmul.f32 %v585, %v80
    %v608 = vmul.f32 %v587, %v81
    %v609 = vmul.f32 %v589, %v82
    %v610 = vmul.f32 %v591, %v83
    %v611 = vmul.f32 %v593, %v84
    %v612 = vmul.f32 %v595, %v85
    %v613 = vmul.f32 %v597, %v86
    %v614 = vpack.c.bf16 %v599, %v598
    %v615 = vpack.c.bf16 %v601, %v600
    %v616 = vpack.c.bf16 %v603, %v602
    %v617 = vpack.c.bf16 %v605, %v604
    %v618 = vpack.c.bf16 %v607, %v606
    %v619 = vpack.c.bf16 %v609, %v608
    %v620 = vpack.c.bf16 %v611, %v610
    %v621 = vpack.c.bf16 %v613, %v612
    %v622 = vld [vmem:[#allocation7] sm:$0xf]
    %v623 = vld [vmem:[#allocation7 + $0x4] sm:$0xf]
    %v624 = vld [vmem:[#allocation7 + $0x8] sm:$0xf]
    %v625 = vld [vmem:[#allocation7 + $0xc] sm:$0xf]
    %v626 = vld [vmem:[#allocation7 + $0x10] sm:$0xf]
    %v627 = vld [vmem:[#allocation7 + $0x14] sm:$0xf]
    %v628 = vld [vmem:[#allocation7 + $0x18] sm:$0xf]
    %v629 = vld [vmem:[#allocation7 + $0x1c] sm:$0xf]
    %v630 = vld [vmem:[#allocation7 + $0x20] sm:$0xf]
    %v631 = vld [vmem:[#allocation7 + $0x24] sm:$0xf]
    %v632 = vld [vmem:[#allocation7 + $0x28] sm:$0xf]
    %v633 = vld [vmem:[#allocation7 + $0x2c] sm:$0xf]
    %v634 = vld [vmem:[#allocation7 + $0x30] sm:$0xf]
    %v635 = vld [vmem:[#allocation7 + $0x34] sm:$0xf]
    %v636 = vld [vmem:[#allocation7 + $0x38] sm:$0xf]
    %v637 = vld [vmem:[#allocation7 + $0x3c] sm:$0xf]
    %v654 = vunpack.c.l.b16 %v622
    %v655 = vunpack.c.l.b16 %v623
    %v656 = vunpack.c.l.b16 %v624
    %v657 = vunpack.c.l.b16 %v625
    %v658 = vunpack.c.l.b16 %v626
    %v659 = vunpack.c.l.b16 %v627
    %v660 = vunpack.c.l.b16 %v628
    %v661 = vunpack.c.l.b16 %v629
    %v662 = vunpack.c.l.b16 %v630
    %v663 = vunpack.c.l.b16 %v631
    %v664 = vunpack.c.l.b16 %v632
    %v665 = vunpack.c.l.b16 %v633
    %v666 = vunpack.c.l.b16 %v634
    %v667 = vunpack.c.l.b16 %v635
    %v668 = vunpack.c.l.b16 %v636
    %v669 = vunpack.c.l.b16 %v637
    %v670 = vpack.c.b16 %v655, %v654
    %v671 = vpack.c.b16 %v657, %v656
    %v672 = vpack.c.b16 %v659, %v658
    %v673 = vpack.c.b16 %v661, %v660
    %v674 = vpack.c.b16 %v663, %v662
    %v675 = vpack.c.b16 %v665, %v664
    %v676 = vpack.c.b16 %v667, %v666
    %v677 = vpack.c.b16 %v669, %v668
    %686 = vmatprep.subr.bf16.mxu0 0
    %687 = vmatpush1.bf16.msra.mxu0 %v677
    %688 = vmatprep.subr.bf16.mxu0 0
    %689 = vmatpush1.bf16.msra.mxu0 %v676
    %690 = vmatprep.subr.bf16.mxu0 0
    %691 = vmatpush1.bf16.msra.mxu0 %v675
    %692 = vmatprep.subr.bf16.mxu0 0
    %693 = vmatpush1.bf16.msra.mxu0 %v674
    %694 = vmatprep.subr.bf16.mxu0 0
    %695 = vmatpush1.bf16.msra.mxu0 %v673
    %696 = vmatprep.subr.bf16.mxu0 0
    %697 = vmatpush1.bf16.msra.mxu0 %v672
    %698 = vmatprep.subr.bf16.mxu0 0
    %699 = vmatpush1.bf16.msra.mxu0 %v671
    %700 = vmatprep.subr.bf16.mxu0 0
    %701 = vmatpush1.bf16.msra.mxu0 %v670
    %702 = vmatprep.subr.bf16.mxu0 0
    %703 = vmatpush2.bf16.msra.mxu0 0
    %704 = vmatprep.subr.bf16.mxu0 0
    %705 = vmatpush2.bf16.msra.mxu0 0
    %706 = vmatprep.subr.bf16.mxu0 0
    %707 = vmatpush2.bf16.msra.mxu0 0
    %708 = vmatprep.subr.bf16.mxu0 0
    %709 = vmatpush2.bf16.msra.mxu0 0
    %710 = vmatprep.subr.bf16.mxu0 0
    %711 = vmatpush2.bf16.msra.mxu0 0
    %712 = vmatprep.subr.bf16.mxu0 0
    %713 = vmatpush2.bf16.msra.mxu0 0
    %714 = vmatprep.subr.bf16.mxu0 0
    %715 = vmatpush2.bf16.msra.mxu0 0
    %716 = vmatprep.subr.bf16.mxu0 0
    %717 = vmatpush2.bf16.msra.mxu0 0
    %718 = vmatprep.mubr.bf16.mxu0 0
    %719 = vmatmul.mubr.bf16.gmra.mxu0 %v614
    %v720 = vpop.f32.mrf.mxu0
    %v721 = vadd.f32 0.0, %v720
    %v722 = vpop.f32.mrf.mxu0
    %v723 = vpop.f32.mrf.mxu0
    %v724 = vadd.f32 0.0, %v723
    %v725 = vpop.f32.mrf.mxu0
    %726 = vmatprep.mubr.bf16.mxu0 0
    %727 = vmatmul.mubr.bf16.gmra.mxu0 %v615
    %v728 = vpop.f32.mrf.mxu0
    %v729 = vadd.f32 0.0, %v728
    %v730 = vpop.f32.mrf.mxu0
    %v731 = vpop.f32.mrf.mxu0
    %v732 = vadd.f32 0.0, %v731
    %v733 = vpop.f32.mrf.mxu0
    %734 = vmatprep.mubr.bf16.mxu0 0
    %735 = vmatmul.mubr.bf16.gmra.mxu0 %v616
    %v736 = vpop.f32.mrf.mxu0
    %v737 = vadd.f32 0.0, %v736
    %v738 = vpop.f32.mrf.mxu0
    %v739 = vpop.f32.mrf.mxu0
    %v740 = vadd.f32 0.0, %v739
    %v741 = vpop.f32.mrf.mxu0
    %742 = vmatprep.mubr.bf16.mxu0 0
    %743 = vmatmul.mubr.bf16.gmra.mxu0 %v617
    %v744 = vpop.f32.mrf.mxu0
    %v745 = vadd.f32 0.0, %v744
    %v746 = vpop.f32.mrf.mxu0
    %v747 = vpop.f32.mrf.mxu0
    %v748 = vadd.f32 0.0, %v747
    %v749 = vpop.f32.mrf.mxu0
    %750 = vmatprep.mubr.bf16.mxu0 0
    %751 = vmatmul.mubr.bf16.gmra.mxu0 %v618
    %v752 = vpop.f32.mrf.mxu0
    %v753 = vadd.f32 0.0, %v752
    %v754 = vpop.f32.mrf.mxu0
    %v755 = vpop.f32.mrf.mxu0
    %v756 = vadd.f32 0.0, %v755
    %v757 = vpop.f32.mrf.mxu0
    %758 = vmatprep.mubr.bf16.mxu0 0
    %759 = vmatmul.mubr.bf16.gmra.mxu0 %v619
    %v760 = vpop.f32.mrf.mxu0
    %v761 = vadd.f32 0.0, %v760
    %v762 = vpop.f32.mrf.mxu0
    %v763 = vpop.f32.mrf.mxu0
    %v764 = vadd.f32 0.0, %v763
    %v765 = vpop.f32.mrf.mxu0
    %766 = vmatprep.mubr.bf16.mxu0 0
    %767 = vmatmul.mubr.bf16.gmra.mxu0 %v620
    %v768 = vpop.f32.mrf.mxu0
    %v769 = vadd.f32 0.0, %v768
    %v770 = vpop.f32.mrf.mxu0
    %v771 = vpop.f32.mrf.mxu0
    %v772 = vadd.f32 0.0, %v771
    %v773 = vpop.f32.mrf.mxu0
    %774 = vmatprep.mubr.bf16.mxu0 0
    %775 = vmatmul.mubr.bf16.gmra.mxu0 %v621
    %v776 = vpop.f32.mrf.mxu0
    %v777 = vadd.f32 0.0, %v776
    %v778 = vpop.f32.mrf.mxu0
    %v779 = vpop.f32.mrf.mxu0
    %v780 = vadd.f32 0.0, %v779
    %v781 = vpop.f32.mrf.mxu0
    %782 = vdwg.mxu0
    %v783 = vadd.f32 %v94, %v721
    %v784 = vadd.f32 %v94, %v724
    %v785 = vadd.f32 %v94, %v729
    %v786 = vadd.f32 %v94, %v732
    %v787 = vadd.f32 %v94, %v737
    %v788 = vadd.f32 %v94, %v740
    %v789 = vadd.f32 %v94, %v745
    %v790 = vadd.f32 %v94, %v748
    %v791 = vadd.f32 %v94, %v753
    %v792 = vadd.f32 %v94, %v756
    %v793 = vadd.f32 %v94, %v761
    %v794 = vadd.f32 %v94, %v764
    %v795 = vadd.f32 %v94, %v769
    %v796 = vadd.f32 %v94, %v772
    %v797 = vadd.f32 %v94, %v777
    %v798 = vadd.f32 %v94, %v780
    %v799 = vmax.f32 %v783, 0.0
    %v800 = vmax.f32 %v784, 0.0
    %v801 = vmax.f32 %v785, 0.0
    %v802 = vmax.f32 %v786, 0.0
    %v803 = vmax.f32 %v787, 0.0
    %v804 = vmax.f32 %v788, 0.0
    %v805 = vmax.f32 %v789, 0.0
    %v806 = vmax.f32 %v790, 0.0
    %v807 = vmax.f32 %v791, 0.0
    %v808 = vmax.f32 %v792, 0.0
    %v809 = vmax.f32 %v793, 0.0
    %v810 = vmax.f32 %v794, 0.0
    %v811 = vmax.f32 %v795, 0.0
    %v812 = vmax.f32 %v796, 0.0
    %v813 = vmax.f32 %v797, 0.0
    %v814 = vmax.f32 %v798, 0.0
    %s815 = sadd.s32 %s53, 1013904242
    %v816 = vstv %s815
    %v817 = vxor.u32 %v816, %v131
    %v818 = vxor.u32 %v816, %v132
    %v819 = vxor.u32 %v816, %v133
    %v820 = vxor.u32 %v816, %v134
    %v821 = vxor.u32 %v816, %v135
    %v822 = vxor.u32 %v816, %v136
    %v823 = vxor.u32 %v816, %v137
    %v824 = vxor.u32 %v816, %v138
    %v825 = vxor.u32 %v816, %v139
    %v826 = vxor.u32 %v816, %v140
    %v827 = vxor.u32 %v816, %v141
    %v828 = vxor.u32 %v816, %v142
    %v829 = vxor.u32 %v816, %v143
    %v830 = vxor.u32 %v816, %v144
    %v831 = vxor.u32 %v816, %v145
    %v832 = vxor.u32 %v816, %v146
    %v833 = vxor.u32 %v817, %v164
    %v834 = vxor.u32 %v818, %v164
    %v835 = vxor.u32 %v819, %v164
    %v836 = vxor.u32 %v820, %v164
    %v837 = vxor.u32 %v821, %v164
    %v838 = vxor.u32 %v822, %v164
    %v839 = vxor.u32 %v823, %v164
    %v840 = vxor.u32 %v824, %v164
    %v841 = vxor.u32 %v825, %v164
    %v842 = vxor.u32 %v826, %v164
    %v843 = vxor.u32 %v827, %v164
    %v844 = vxor.u32 %v828, %v164
    %v845 = vxor.u32 %v829, %v164
    %v846 = vxor.u32 %v830, %v164
    %v847 = vxor.u32 %v831, %v164
    %v848 = vxor.u32 %v832, %v164
    %v849 = vshrl.u32 %v833, 16
    %v850 = vshrl.u32 %v834, 16
    %v851 = vshrl.u32 %v835, 16
    %v852 = vshrl.u32 %v836, 16
    %v853 = vshrl.u32 %v837, 16
    %v854 = vshrl.u32 %v838, 16
    %v855 = vshrl.u32 %v839, 16
    %v856 = vshrl.u32 %v840, 16
    %v857 = vshrl.u32 %v841, 16
    %v858 = vshrl.u32 %v842, 16
    %v859 = vshrl.u32 %v843, 16
    %v860 = vshrl.u32 %v844, 16
    %v861 = vshrl.u32 %v845, 16
    %v862 = vshrl.u32 %v846, 16
    %v863 = vshrl.u32 %v847, 16
    %v864 = vshrl.u32 %v848, 16
    %v865 = vxor.u32 %v833, %v849
    %v866 = vxor.u32 %v834, %v850
    %v867 = vxor.u32 %v835, %v851
    %v868 = vxor.u32 %v836, %v852
    %v869 = vxor.u32 %v837, %v853
    %v870 = vxor.u32 %v838, %v854
    %v871 = vxor.u32 %v839, %v855
    %v872 = vxor.u32 %v840, %v856
    %v873 = vxor.u32 %v841, %v857
    %v874 = vxor.u32 %v842, %v858
    %v875 = vxor.u32 %v843, %v859
    %v876 = vxor.u32 %v844, %v860
    %v877 = vxor.u32 %v845, %v861
    %v878 = vxor.u32 %v846, %v862
    %v879 = vxor.u32 %v847, %v863
    %v880 = vxor.u32 %v848, %v864
    %v881 = vmul.u32 %v865, 2146121005
    %v882 = vmul.u32 %v866, 2146121005
    %v883 = vmul.u32 %v867, 2146121005
    %v884 = vmul.u32 %v868, 2146121005
    %v885 = vmul.u32 %v869, 2146121005
    %v886 = vmul.u32 %v870, 2146121005
    %v887 = vmul.u32 %v871, 2146121005
    %v888 = vmul.u32 %v872, 2146121005
    %v889 = vmul.u32 %v873, 2146121005
    %v890 = vmul.u32 %v874, 2146121005
    %v891 = vmul.u32 %v875, 2146121005
    %v892 = vmul.u32 %v876, 2146121005
    %v893 = vmul.u32 %v877, 2146121005
    %v894 = vmul.u32 %v878, 2146121005
    %v895 = vmul.u32 %v879, 2146121005
    %v896 = vmul.u32 %v880, 2146121005
    %v897 = vshrl.u32 %v881, 15
    %v898 = vshrl.u32 %v882, 15
    %v899 = vshrl.u32 %v883, 15
    %v900 = vshrl.u32 %v884, 15
    %v901 = vshrl.u32 %v885, 15
    %v902 = vshrl.u32 %v886, 15
    %v903 = vshrl.u32 %v887, 15
    %v904 = vshrl.u32 %v888, 15
    %v905 = vshrl.u32 %v889, 15
    %v906 = vshrl.u32 %v890, 15
    %v907 = vshrl.u32 %v891, 15
    %v908 = vshrl.u32 %v892, 15
    %v909 = vshrl.u32 %v893, 15
    %v910 = vshrl.u32 %v894, 15
    %v911 = vshrl.u32 %v895, 15
    %v912 = vshrl.u32 %v896, 15
    %v913 = vxor.u32 %v881, %v897
    %v914 = vxor.u32 %v882, %v898
    %v915 = vxor.u32 %v883, %v899
    %v916 = vxor.u32 %v884, %v900
    %v917 = vxor.u32 %v885, %v901
    %v918 = vxor.u32 %v886, %v902
    %v919 = vxor.u32 %v887, %v903
    %v920 = vxor.u32 %v888, %v904
    %v921 = vxor.u32 %v889, %v905
    %v922 = vxor.u32 %v890, %v906
    %v923 = vxor.u32 %v891, %v907
    %v924 = vxor.u32 %v892, %v908
    %v925 = vxor.u32 %v893, %v909
    %v926 = vxor.u32 %v894, %v910
    %v927 = vxor.u32 %v895, %v911
    %v928 = vxor.u32 %v896, %v912
    %v929 = vmul.u32 %v913, 2221713035
    %v930 = vmul.u32 %v914, 2221713035
    %v931 = vmul.u32 %v915, 2221713035
    %v932 = vmul.u32 %v916, 2221713035
    %v933 = vmul.u32 %v917, 2221713035
    %v934 = vmul.u32 %v918, 2221713035
    %v935 = vmul.u32 %v919, 2221713035
    %v936 = vmul.u32 %v920, 2221713035
    %v937 = vmul.u32 %v921, 2221713035
    %v938 = vmul.u32 %v922, 2221713035
    %v939 = vmul.u32 %v923, 2221713035
    %v940 = vmul.u32 %v924, 2221713035
    %v941 = vmul.u32 %v925, 2221713035
    %v942 = vmul.u32 %v926, 2221713035
    %v943 = vmul.u32 %v927, 2221713035
    %v944 = vmul.u32 %v928, 2221713035
    %v945 = vshrl.u32 %v929, 16
    %v946 = vshrl.u32 %v930, 16
    %v947 = vshrl.u32 %v931, 16
    %v948 = vshrl.u32 %v932, 16
    %v949 = vshrl.u32 %v933, 16
    %v950 = vshrl.u32 %v934, 16
    %v951 = vshrl.u32 %v935, 16
    %v952 = vshrl.u32 %v936, 16
    %v953 = vshrl.u32 %v937, 16
    %v954 = vshrl.u32 %v938, 16
    %v955 = vshrl.u32 %v939, 16
    %v956 = vshrl.u32 %v940, 16
    %v957 = vshrl.u32 %v941, 16
    %v958 = vshrl.u32 %v942, 16
    %v959 = vshrl.u32 %v943, 16
    %v960 = vshrl.u32 %v944, 16
    %v961 = vxor.u32 %v929, %v945
    %v962 = vxor.u32 %v930, %v946
    %v963 = vxor.u32 %v931, %v947
    %v964 = vxor.u32 %v932, %v948
    %v965 = vxor.u32 %v933, %v949
    %v966 = vxor.u32 %v934, %v950
    %v967 = vxor.u32 %v935, %v951
    %v968 = vxor.u32 %v936, %v952
    %v969 = vxor.u32 %v937, %v953
    %v970 = vxor.u32 %v938, %v954
    %v971 = vxor.u32 %v939, %v955
    %v972 = vxor.u32 %v940, %v956
    %v973 = vxor.u32 %v941, %v957
    %v974 = vxor.u32 %v942, %v958
    %v975 = vxor.u32 %v943, %v959
    %v976 = vxor.u32 %v944, %v960
    %v977 = vshrl.u32 %v961, 8
    %v978 = vshrl.u32 %v962, 8
    %v979 = vshrl.u32 %v963, 8
    %v980 = vshrl.u32 %v964, 8
    %v981 = vshrl.u32 %v965, 8
    %v982 = vshrl.u32 %v966, 8
    %v983 = vshrl.u32 %v967, 8
    %v984 = vshrl.u32 %v968, 8
    %v985 = vshrl.u32 %v969, 8
    %v986 = vshrl.u32 %v970, 8
    %v987 = vshrl.u32 %v971, 8
    %v988 = vshrl.u32 %v972, 8
    %v989 = vshrl.u32 %v973, 8
    %v990 = vshrl.u32 %v974, 8
    %v991 = vshrl.u32 %v975, 8
    %v992 = vshrl.u32 %v976, 8
    %v993 = vcvt.s32.f32 %v977
    %v994 = vcvt.s32.f32 %v978
    %v995 = vcvt.s32.f32 %v979
    %v996 = vcvt.s32.f32 %v980
    %v997 = vcvt.s32.f32 %v981
    %v998 = vcvt.s32.f32 %v982
    %v999 = vcvt.s32.f32 %v983
    %v1000 = vcvt.s32.f32 %v984
    %v1001 = vcvt.s32.f32 %v985
    %v1002 = vcvt.s32.f32 %v986
    %v1003 = vcvt.s32.f32 %v987
    %v1004 = vcvt.s32.f32 %v988
    %v1005 = vcvt.s32.f32 %v989
    %v1006 = vcvt.s32.f32 %v990
    %v1007 = vcvt.s32.f32 %v991
    %v1008 = vcvt.s32.f32 %v992
    %v1009 = vmul.f32 %v993, 5.9604645e-08
    %v1010 = vmul.f32 %v994, 5.9604645e-08
    %v1011 = vmul.f32 %v995, 5.9604645e-08
    %v1012 = vmul.f32 %v996, 5.9604645e-08
    %v1013 = vmul.f32 %v997, 5.9604645e-08
    %v1014 = vmul.f32 %v998, 5.9604645e-08
    %v1015 = vmul.f32 %v999, 5.9604645e-08
    %v1016 = vmul.f32 %v1000, 5.9604645e-08
    %v1017 = vmul.f32 %v1001, 5.9604645e-08
    %v1018 = vmul.f32 %v1002, 5.9604645e-08
    %v1019 = vmul.f32 %v1003, 5.9604645e-08
    %v1020 = vmul.f32 %v1004, 5.9604645e-08
    %v1021 = vmul.f32 %v1005, 5.9604645e-08
    %v1022 = vmul.f32 %v1006, 5.9604645e-08
    %v1023 = vmul.f32 %v1007, 5.9604645e-08
    %v1024 = vmul.f32 %v1008, 5.9604645e-08
    %v1025 = vmax.f32 %v1009, 1e-06
    %v1026 = vmax.f32 %v1010, 1e-06
    %v1027 = vmax.f32 %v1011, 1e-06
    %v1028 = vmax.f32 %v1012, 1e-06
    %v1029 = vmax.f32 %v1013, 1e-06
    %v1030 = vmax.f32 %v1014, 1e-06
    %v1031 = vmax.f32 %v1015, 1e-06
    %v1032 = vmax.f32 %v1016, 1e-06
    %v1033 = vmax.f32 %v1017, 1e-06
    %v1034 = vmax.f32 %v1018, 1e-06
    %v1035 = vmax.f32 %v1019, 1e-06
    %v1036 = vmax.f32 %v1020, 1e-06
    %v1037 = vmax.f32 %v1021, 1e-06
    %v1038 = vmax.f32 %v1022, 1e-06
    %v1039 = vmax.f32 %v1023, 1e-06
    %v1040 = vmax.f32 %v1024, 1e-06
    %v1041 = vmin.f32 %v1025, 0.999999
    %v1042 = vmin.f32 %v1026, 0.999999
    %v1043 = vmin.f32 %v1027, 0.999999
    %v1044 = vmin.f32 %v1028, 0.999999
    %v1045 = vmin.f32 %v1029, 0.999999
    %v1046 = vmin.f32 %v1030, 0.999999
    %v1047 = vmin.f32 %v1031, 0.999999
    %v1048 = vmin.f32 %v1032, 0.999999
    %v1049 = vmin.f32 %v1033, 0.999999
    %v1050 = vmin.f32 %v1034, 0.999999
    %v1051 = vmin.f32 %v1035, 0.999999
    %v1052 = vmin.f32 %v1036, 0.999999
    %v1053 = vmin.f32 %v1037, 0.999999
    %v1054 = vmin.f32 %v1038, 0.999999
    %v1055 = vmin.f32 %v1039, 0.999999
    %v1056 = vmin.f32 %v1040, 0.999999
    %vm1057 = vcmp.lt.f32.partialorder %v1041, 0.5
    %vm1058 = vcmp.lt.f32.partialorder %v1042, 0.5
    %vm1059 = vcmp.lt.f32.partialorder %v1043, 0.5
    %vm1060 = vcmp.lt.f32.partialorder %v1044, 0.5
    %vm1061 = vcmp.lt.f32.partialorder %v1045, 0.5
    %vm1062 = vcmp.lt.f32.partialorder %v1046, 0.5
    %vm1063 = vcmp.lt.f32.partialorder %v1047, 0.5
    %vm1064 = vcmp.lt.f32.partialorder %v1048, 0.5
    %vm1065 = vcmp.lt.f32.partialorder %v1049, 0.5
    %vm1066 = vcmp.lt.f32.partialorder %v1050, 0.5
    %vm1067 = vcmp.lt.f32.partialorder %v1051, 0.5
    %vm1068 = vcmp.lt.f32.partialorder %v1052, 0.5
    %vm1069 = vcmp.lt.f32.partialorder %v1053, 0.5
    %vm1070 = vcmp.lt.f32.partialorder %v1054, 0.5
    %vm1071 = vcmp.lt.f32.partialorder %v1055, 0.5
    %vm1072 = vcmp.lt.f32.partialorder %v1056, 0.5
    %v1073 = vmul.f32 %v799, 2.0
    %v1074 = vmul.f32 %v800, 2.0
    %v1075 = vmul.f32 %v801, 2.0
    %v1076 = vmul.f32 %v802, 2.0
    %v1077 = vmul.f32 %v803, 2.0
    %v1078 = vmul.f32 %v804, 2.0
    %v1079 = vmul.f32 %v805, 2.0
    %v1080 = vmul.f32 %v806, 2.0
    %v1081 = vmul.f32 %v807, 2.0
    %v1082 = vmul.f32 %v808, 2.0
    %v1083 = vmul.f32 %v809, 2.0
    %v1084 = vmul.f32 %v810, 2.0
    %v1085 = vmul.f32 %v811, 2.0
    %v1086 = vmul.f32 %v812, 2.0
    %v1087 = vmul.f32 %v813, 2.0
    %v1088 = vmul.f32 %v814, 2.0
    %v1089 = vsel %vm1057, %v1073, 0.0
    %v1090 = vsel %vm1058, %v1074, 0.0
    %v1091 = vsel %vm1059, %v1075, 0.0
    %v1092 = vsel %vm1060, %v1076, 0.0
    %v1093 = vsel %vm1061, %v1077, 0.0
    %v1094 = vsel %vm1062, %v1078, 0.0
    %v1095 = vsel %vm1063, %v1079, 0.0
    %v1096 = vsel %vm1064, %v1080, 0.0
    %v1097 = vsel %vm1065, %v1081, 0.0
    %v1098 = vsel %vm1066, %v1082, 0.0
    %v1099 = vsel %vm1067, %v1083, 0.0
    %v1100 = vsel %vm1068, %v1084, 0.0
    %v1101 = vsel %vm1069, %v1085, 0.0
    %v1102 = vsel %vm1070, %v1086, 0.0
    %v1103 = vsel %vm1071, %v1087, 0.0
    %v1104 = vsel %vm1072, %v1088, 0.0
    %1105 = vst [vmem:[#allocation9] sm:$0xff] %v1089
    %1106 = vst [vmem:[#allocation9 + $0x8] sm:$0xff] %v1090
    %1107 = vst [vmem:[#allocation9 + $0x10] sm:$0xff] %v1091
    %1108 = vst [vmem:[#allocation9 + $0x18] sm:$0xff] %v1092
    %1109 = vst [vmem:[#allocation9 + $0x20] sm:$0xff] %v1093
    %1110 = vst [vmem:[#allocation9 + $0x28] sm:$0xff] %v1094
    %1111 = vst [vmem:[#allocation9 + $0x30] sm:$0xff] %v1095
    %1112 = vst [vmem:[#allocation9 + $0x38] sm:$0xff] %v1096
    %1113 = vst [vmem:[#allocation9 + $0x40] sm:$0xff] %v1097
    %1114 = vst [vmem:[#allocation9 + $0x48] sm:$0xff] %v1098
    %1115 = vst [vmem:[#allocation9 + $0x50] sm:$0xff] %v1099
    %1116 = vst [vmem:[#allocation9 + $0x58] sm:$0xff] %v1100
    %1117 = vst [vmem:[#allocation9 + $0x60] sm:$0xff] %v1101
    %1118 = vst [vmem:[#allocation9 + $0x68] sm:$0xff] %v1102
    %1119 = vst [vmem:[#allocation9 + $0x70] sm:$0xff] %v1103
    %1120 = vst [vmem:[#allocation9 + $0x78] sm:$0xff] %v1104
    // Predicated region
    $region30: #{tpu_custom_call.1} parent=1 // pred_check
      _
    $region31: #{tpu_custom_call.1} parent=1 // pred_check_branch
      %1122 = sbr.rel (0) target = $region33
    $region32: #{tpu_custom_call.1} parent=1 // pred_region
      %s1124 = ssub.s32 2048, 2048
      %1125 = vsyncadd [#allocation6], %s1124
      %s1126 = sshll.u32 [#allocation9], 4
      %s1127 = int_to_ptr.vmem [resolvable:$true] %s1126
      %1132 = dma.vmem_to_hbm [thread:$0]  %s1127, 2048, %s5, [#allocation6], 128, 128, 8
    $region33: #{tpu_custom_call.1} parent=1 // pred_fallthru
      _
    // Predicated region
    $region34: #{tpu_custom_call.1} parent=1 // pred_check
      _
    $region35: #{tpu_custom_call.1} parent=1 // pred_check_branch
      %1134 = sbr.rel (0) target = $region37
    $region36: #{tpu_custom_call.1} parent=1 // pred_region
      %1135 = dma.done [#allocation6], 2048
    $region37: #{tpu_custom_call.1} parent=1 // pred_fallthru
      _
    %1136 = vsyncpa [#allocation5], 1
    %1137 = vsyncpa [#allocation8], 1
    %1138 = vsyncpa [#allocation6], 1

</llo_original>
